<compile_context>
chip_gen: v6e
topology: v6e:2x2x1
jax: 0.10.0
libtpu: 0.0.40
codegen_flags: <defaults>
</compile_context>

<pallas_src>
import functools

import jax
import jax.numpy as jnp
from jax.experimental import pallas as pl
from jax.experimental.pallas import tpu as pltpu


def _dw3x3_s2_kernel(x_ref, w_ref, o_ref):
    """Depthwise 3x3 stride-2 conv, one row-tile of the output.

    x_ref: (2, 2, OH+1, OW+1, Cp)  parity-major space-to-depth padded input
    w_ref: (9, Cp)                 per-channel filter taps (kh*3 + kw major)
    o_ref: (TOH, OW, Cp)           output row tile
    """
    TOH, OW, Cp = o_ref.shape
    r0 = pl.multiple_of(pl.program_id(0) * TOH, TOH)

    # Load all taps once, fp32, outside the tap loops.
    w_all = w_ref[...].astype(jnp.float32)                 # (9, Cp)

    acc = jnp.zeros((TOH, OW, Cp), jnp.float32)
    for kh in range(3):
        ph, ho = kh % 2, kh // 2                            # parity / row offset
        for kw in range(3):
            pw, wo = kw % 2, kw // 2                        # parity / col offset
            patch = x_ref[ph, pw, pl.ds(r0 + ho, TOH), pl.ds(wo, OW), :]
            tap = w_all[kh * 3 + kw].reshape(1, 1, Cp)
            acc = acc + patch.astype(jnp.float32) * tap
    o_ref[...] = acc.astype(o_ref.dtype)


@jax.jit
def depthwise_conv3x3_s2(x_nchw, w_oihw):
    """Equivalent of nn.Conv2d(C, C, 3, stride=2, padding=1, groups=C, bias=False).

    x_nchw: (1, C, H, W), w_oihw: (C, 1, 3, 3). Returns (1, C, H//2, W//2).
    """
    N, C, H, W = x_nchw.shape
    assert N == 1 and H % 2 == 0 and W % 2 == 0
    OH, OW = H // 2, W // 2

    LANES = 128
    Cp = ((C + LANES - 1) // LANES) * LANES                 # 96 -> 128

    # ---- wrapper glue: NCHW -> HWC, lane-pad C, spatial zero-pad, space-to-depth.
    x = jnp.transpose(x_nchw[0], (1, 2, 0))                 # (H, W, C)
    xp = jnp.pad(x, ((1, 1), (1, 1), (0, Cp - C)))          # (H+2, W+2, Cp)
    x5 = xp.reshape(OH + 1, 2, OW + 1, 2, Cp)               # contiguous reshape
    x5 = jnp.transpose(x5, (1, 3, 0, 2, 4))                 # (2, 2, OH+1, OW+1, Cp)

    # (C, 1, 3, 3) -> (9, Cp): tap-major, lane-dense channels.
    w = jnp.transpose(w_oihw[:, 0, :, :], (1, 2, 0)).reshape(9, C)
    w = jnp.pad(w, ((0, 0), (0, Cp - C)))                   # (9, Cp)

    # Row-tile size: largest of these that divides OH (bounds the accumulator).
    TOH = 1
    for t in (16, 8, 4, 2):
        if OH % t == 0:
            TOH = t
            break
    grid = (OH // TOH,)

    # Generous VMEM budget: resident input (x2 for pipelining) + out tiles + taps.
    itemsize = x5.dtype.itemsize
    vmem_bytes = (2 * x5.size * itemsize
                  + 6 * TOH * OW * Cp * itemsize
                  + 2 * w.size * itemsize
                  + (4 << 20))
    vmem_limit = int(min(max(vmem_bytes, 16 << 20), 48 << 20))

    out = pl.pallas_call(
        _dw3x3_s2_kernel,
        out_shape=jax.ShapeDtypeStruct((OH, OW, Cp), x_nchw.dtype),
        grid_spec=pltpu.PrefetchScalarGridSpec(
            num_scalar_prefetch=0,
            grid=grid,
            in_specs=[
                # Full padded input resident across all row tiles.
                pl.BlockSpec(x5.shape, lambda i: (0, 0, 0, 0, 0)),
                pl.BlockSpec(w.shape, lambda i: (0, 0)),
            ],
            out_specs=pl.BlockSpec((TOH, OW, Cp), lambda i: (i, 0, 0)),
        ),
        compiler_params=pltpu.CompilerParams(
            dimension_semantics=("parallel",),      # shards row tiles on v7x megacore
            vmem_limit_bytes=vmem_limit,
        ),
    )(x5, w)

    # (OH, OW, Cp) -> drop channel padding -> NCHW
    y = out[:, :, :C]
    return jnp.transpose(y, (2, 0, 1))[None]
    # TODO(synk): for N > 1 fold the batch into a second parallel grid axis
    # instead of the N == 1 assert; the module under translation uses N == 1.


if __name__ == "__main__":
    key = jax.random.PRNGKey(0)
    kx, kw = jax.random.split(key)

    # Small shapes consistent with the module: channels fixed at 96 by the
    # weights, spatial reduced from 112 -> 16 for the demo.
    C, H, W = 96, 16, 16
    x18 = jax.random.normal(kx, (1, C, H, W), dtype=jnp.float32)
    weight = jax.random.normal(kw, (C, 1, 3, 3), dtype=jnp.float32) * 0.1

    x19 = depthwise_conv3x3_s2(x18, weight)
    jax.block_until_ready(x19)

    # Reference check against XLA's grouped conv.
    ref = jax.lax.conv_general_dilated(
        x18, weight, window_strides=(2, 2), padding=((1, 1), (1, 1)),
        feature_group_count=C, dimension_numbers=("NCHW", "OIHW", "NCHW"))
    assert x19.shape == (1, C, H // 2, W // 2), x19.shape
    assert jnp.allclose(x19, ref, atol=1e-5, rtol=1e-5), "mismatch vs reference conv"

    print("KERNEL_OK")
</pallas_src>

<mosaic_0001>
module attributes {stable_mosaic.version = 11 : i64} {
  func.func @_dw3x3_s2_kernel(%arg0: i32, %arg1: memref<2x2x9x9x128xf32, #tpu.memory_space<vmem>>, %arg2: memref<9x128xf32, #tpu.memory_space<vmem>>, %arg3: memref<8x8x128xf32, #tpu.memory_space<vmem>>) attributes {dimension_semantics = [#tpu.dimension_semantics<parallel>], iteration_bounds = array<i64: 1>, scalar_prefetch = 0 : i64, scratch_operands = 0 : i64, tpu.core_type = #tpu.core_type<tc>, window_params = [{pipeline_mode = #tpu.pipeline_mode<synchronous>, transform_indices = @transform_0, window_bounds = array<i64: 2, 2, 9, 9, 128>}, {pipeline_mode = #tpu.pipeline_mode<synchronous>, transform_indices = @transform_1, window_bounds = array<i64: 9, 128>}, {transform_indices = @transform_2, window_bounds = array<i64: 8, 8, 128>}]} {
    %c8_i32 = arith.constant 8 : i32
    %0 = arith.muli %arg0, %c8_i32 : i32
    %1 = tpu.assume_multiple %0, 8 : i32
    %c0 = arith.constant 0 : index
    %c0_0 = arith.constant 0 : index
    %2 = vector.load %arg2[%c0, %c0_0] : memref<9x128xf32, #tpu.memory_space<vmem>>, vector<9x128xf32>
    %cst = arith.constant 0.000000e+00 : f32
    %3 = vector.broadcast %cst : f32 to vector<8x8x128xf32>
    %c0_i32 = arith.constant 0 : i32
    %4 = arith.addi %1, %c0_i32 : i32
    %c0_1 = arith.constant 0 : index
    %c0_2 = arith.constant 0 : index
    %5 = arith.index_cast %4 : i32 to index
    %c0_3 = arith.constant 0 : index
    %c0_4 = arith.constant 0 : index
    %6 = vector.load %arg1[%c0_1, %c0_2, %5, %c0_3, %c0_4] : memref<2x2x9x9x128xf32, #tpu.memory_space<vmem>>, vector<1x1x8x8x128xf32>
    %7 = vector.shape_cast %6 : vector<1x1x8x8x128xf32> to vector<8x8x128xf32>
    %8 = vector.extract_strided_slice %2 {offsets = [0, 0], sizes = [1, 128], strides = [1, 1]} : vector<9x128xf32> to vector<1x128xf32>
    %9 = vector.shape_cast %8 : vector<1x128xf32> to vector<128xf32>
    %10 = vector.shape_cast %9 : vector<128xf32> to vector<1x1x128xf32>
    %11 = vector.broadcast %10 : vector<1x1x128xf32> to vector<8x8x128xf32>
    %12 = arith.mulf %7, %11 : vector<8x8x128xf32>
    %13 = arith.addf %3, %12 : vector<8x8x128xf32>
    %c0_i32_5 = arith.constant 0 : i32
    %14 = arith.addi %1, %c0_i32_5 : i32
    %c0_6 = arith.constant 0 : index
    %c1 = arith.constant 1 : index
    %15 = arith.index_cast %14 : i32 to index
    %c0_7 = arith.constant 0 : index
    %c0_8 = arith.constant 0 : index
    %16 = vector.load %arg1[%c0_6, %c1, %15, %c0_7, %c0_8] : memref<2x2x9x9x128xf32, #tpu.memory_space<vmem>>, vector<1x1x8x8x128xf32>
    %17 = vector.shape_cast %16 : vector<1x1x8x8x128xf32> to vector<8x8x128xf32>
    %18 = vector.extract_strided_slice %2 {offsets = [1, 0], sizes = [1, 128], strides = [1, 1]} : vector<9x128xf32> to vector<1x128xf32>
    %19 = vector.shape_cast %18 : vector<1x128xf32> to vector<128xf32>
    %20 = vector.shape_cast %19 : vector<128xf32> to vector<1x1x128xf32>
    %21 = vector.broadcast %20 : vector<1x1x128xf32> to vector<8x8x128xf32>
    %22 = arith.mulf %17, %21 : vector<8x8x128xf32>
    %23 = arith.addf %13, %22 : vector<8x8x128xf32>
    %c0_i32_9 = arith.constant 0 : i32
    %24 = arith.addi %1, %c0_i32_9 : i32
    %c0_10 = arith.constant 0 : index
    %c0_11 = arith.constant 0 : index
    %25 = arith.index_cast %24 : i32 to index
    %c1_12 = arith.constant 1 : index
    %c0_13 = arith.constant 0 : index
    %26 = vector.load %arg1[%c0_10, %c0_11, %25, %c1_12, %c0_13] : memref<2x2x9x9x128xf32, #tpu.memory_space<vmem>>, vector<1x1x8x8x128xf32>
    %27 = vector.shape_cast %26 : vector<1x1x8x8x128xf32> to vector<8x8x128xf32>
    %28 = vector.extract_strided_slice %2 {offsets = [2, 0], sizes = [1, 128], strides = [1, 1]} : vector<9x128xf32> to vector<1x128xf32>
    %29 = vector.shape_cast %28 : vector<1x128xf32> to vector<128xf32>
    %30 = vector.shape_cast %29 : vector<128xf32> to vector<1x1x128xf32>
    %31 = vector.broadcast %30 : vector<1x1x128xf32> to vector<8x8x128xf32>
    %32 = arith.mulf %27, %31 : vector<8x8x128xf32>
    %33 = arith.addf %23, %32 : vector<8x8x128xf32>
    %c0_i32_14 = arith.constant 0 : i32
    %34 = arith.addi %1, %c0_i32_14 : i32
    %c1_15 = arith.constant 1 : index
    %c0_16 = arith.constant 0 : index
    %35 = arith.index_cast %34 : i32 to index
    %c0_17 = arith.constant 0 : index
    %c0_18 = arith.constant 0 : index
    %36 = vector.load %arg1[%c1_15, %c0_16, %35, %c0_17, %c0_18] : memref<2x2x9x9x128xf32, #tpu.memory_space<vmem>>, vector<1x1x8x8x128xf32>
    %37 = vector.shape_cast %36 : vector<1x1x8x8x128xf32> to vector<8x8x128xf32>
    %38 = vector.extract_strided_slice %2 {offsets = [3, 0], sizes = [1, 128], strides = [1, 1]} : vector<9x128xf32> to vector<1x128xf32>
    %39 = vector.shape_cast %38 : vector<1x128xf32> to vector<128xf32>
    %40 = vector.shape_cast %39 : vector<128xf32> to vector<1x1x128xf32>
    %41 = vector.broadcast %40 : vector<1x1x128xf32> to vector<8x8x128xf32>
    %42 = arith.mulf %37, %41 : vector<8x8x128xf32>
    %43 = arith.addf %33, %42 : vector<8x8x128xf32>
    %c0_i32_19 = arith.constant 0 : i32
    %44 = arith.addi %1, %c0_i32_19 : i32
    %c1_20 = arith.constant 1 : index
    %c1_21 = arith.constant 1 : index
    %45 = arith.index_cast %44 : i32 to index
    %c0_22 = arith.constant 0 : index
    %c0_23 = arith.constant 0 : index
    %46 = vector.load %arg1[%c1_20, %c1_21, %45, %c0_22, %c0_23] : memref<2x2x9x9x128xf32, #tpu.memory_space<vmem>>, vector<1x1x8x8x128xf32>
    %47 = vector.shape_cast %46 : vector<1x1x8x8x128xf32> to vector<8x8x128xf32>
    %48 = vector.extract_strided_slice %2 {offsets = [4, 0], sizes = [1, 128], strides = [1, 1]} : vector<9x128xf32> to vector<1x128xf32>
    %49 = vector.shape_cast %48 : vector<1x128xf32> to vector<128xf32>
    %50 = vector.shape_cast %49 : vector<128xf32> to vector<1x1x128xf32>
    %51 = vector.broadcast %50 : vector<1x1x128xf32> to vector<8x8x128xf32>
    %52 = arith.mulf %47, %51 : vector<8x8x128xf32>
    %53 = arith.addf %43, %52 : vector<8x8x128xf32>
    %c0_i32_24 = arith.constant 0 : i32
    %54 = arith.addi %1, %c0_i32_24 : i32
    %c1_25 = arith.constant 1 : index
    %c0_26 = arith.constant 0 : index
    %55 = arith.index_cast %54 : i32 to index
    %c1_27 = arith.constant 1 : index
    %c0_28 = arith.constant 0 : index
    %56 = vector.load %arg1[%c1_25, %c0_26, %55, %c1_27, %c0_28] : memref<2x2x9x9x128xf32, #tpu.memory_space<vmem>>, vector<1x1x8x8x128xf32>
    %57 = vector.shape_cast %56 : vector<1x1x8x8x128xf32> to vector<8x8x128xf32>
    %58 = vector.extract_strided_slice %2 {offsets = [5, 0], sizes = [1, 128], strides = [1, 1]} : vector<9x128xf32> to vector<1x128xf32>
    %59 = vector.shape_cast %58 : vector<1x128xf32> to vector<128xf32>
    %60 = vector.shape_cast %59 : vector<128xf32> to vector<1x1x128xf32>
    %61 = vector.broadcast %60 : vector<1x1x128xf32> to vector<8x8x128xf32>
    %62 = arith.mulf %57, %61 : vector<8x8x128xf32>
    %63 = arith.addf %53, %62 : vector<8x8x128xf32>
    %c1_i32 = arith.constant 1 : i32
    %64 = arith.addi %1, %c1_i32 : i32
    %c0_29 = arith.constant 0 : index
    %c0_30 = arith.constant 0 : index
    %65 = arith.index_cast %64 : i32 to index
    %c0_31 = arith.constant 0 : index
    %c0_32 = arith.constant 0 : index
    %66 = vector.load %arg1[%c0_29, %c0_30, %65, %c0_31, %c0_32] : memref<2x2x9x9x128xf32, #tpu.memory_space<vmem>>, vector<1x1x8x8x128xf32>
    %67 = vector.shape_cast %66 : vector<1x1x8x8x128xf32> to vector<8x8x128xf32>
    %68 = vector.extract_strided_slice %2 {offsets = [6, 0], sizes = [1, 128], strides = [1, 1]} : vector<9x128xf32> to vector<1x128xf32>
    %69 = vector.shape_cast %68 : vector<1x128xf32> to vector<128xf32>
    %70 = vector.shape_cast %69 : vector<128xf32> to vector<1x1x128xf32>
    %71 = vector.broadcast %70 : vector<1x1x128xf32> to vector<8x8x128xf32>
    %72 = arith.mulf %67, %71 : vector<8x8x128xf32>
    %73 = arith.addf %63, %72 : vector<8x8x128xf32>
    %c1_i32_33 = arith.constant 1 : i32
    %74 = arith.addi %1, %c1_i32_33 : i32
    %c0_34 = arith.constant 0 : index
    %c1_35 = arith.constant 1 : index
    %75 = arith.index_cast %74 : i32 to index
    %c0_36 = arith.constant 0 : index
    %c0_37 = arith.constant 0 : index
    %76 = vector.load %arg1[%c0_34, %c1_35, %75, %c0_36, %c0_37] : memref<2x2x9x9x128xf32, #tpu.memory_space<vmem>>, vector<1x1x8x8x128xf32>
    %77 = vector.shape_cast %76 : vector<1x1x8x8x128xf32> to vector<8x8x128xf32>
    %78 = vector.extract_strided_slice %2 {offsets = [7, 0], sizes = [1, 128], strides = [1, 1]} : vector<9x128xf32> to vector<1x128xf32>
    %79 = vector.shape_cast %78 : vector<1x128xf32> to vector<128xf32>
    %80 = vector.shape_cast %79 : vector<128xf32> to vector<1x1x128xf32>
    %81 = vector.broadcast %80 : vector<1x1x128xf32> to vector<8x8x128xf32>
    %82 = arith.mulf %77, %81 : vector<8x8x128xf32>
    %83 = arith.addf %73, %82 : vector<8x8x128xf32>
    %c1_i32_38 = arith.constant 1 : i32
    %84 = arith.addi %1, %c1_i32_38 : i32
    %c0_39 = arith.constant 0 : index
    %c0_40 = arith.constant 0 : index
    %85 = arith.index_cast %84 : i32 to index
    %c1_41 = arith.constant 1 : index
    %c0_42 = arith.constant 0 : index
    %86 = vector.load %arg1[%c0_39, %c0_40, %85, %c1_41, %c0_42] : memref<2x2x9x9x128xf32, #tpu.memory_space<vmem>>, vector<1x1x8x8x128xf32>
    %87 = vector.shape_cast %86 : vector<1x1x8x8x128xf32> to vector<8x8x128xf32>
    %88 = vector.extract_strided_slice %2 {offsets = [8, 0], sizes = [1, 128], strides = [1, 1]} : vector<9x128xf32> to vector<1x128xf32>
    %89 = vector.shape_cast %88 : vector<1x128xf32> to vector<128xf32>
    %90 = vector.shape_cast %89 : vector<128xf32> to vector<1x1x128xf32>
    %91 = vector.broadcast %90 : vector<1x1x128xf32> to vector<8x8x128xf32>
    %92 = arith.mulf %87, %91 : vector<8x8x128xf32>
    %93 = arith.addf %83, %92 : vector<8x8x128xf32>
    %c0_43 = arith.constant 0 : index
    %c0_44 = arith.constant 0 : index
    %c0_45 = arith.constant 0 : index
    %94 = vector.load %arg3[%c0_43, %c0_44, %c0_45] : memref<8x8x128xf32, #tpu.memory_space<vmem>>, vector<8x8x128xf32>
    tpu.vector_store %arg3[%c0_43, %c0_44, %c0_45], %93 {strides = array<i32>} : memref<8x8x128xf32, #tpu.memory_space<vmem>>, vector<8x8x128xf32>,
    return
  }
  func.func @transform_0(%arg0: i32) -> (i32, i32, i32, i32, i32) {
    %c0_i32 = arith.constant 0 : i32
    %c0_i32_0 = arith.constant 0 : i32
    %c0_i32_1 = arith.constant 0 : i32
    %c0_i32_2 = arith.constant 0 : i32
    %c0_i32_3 = arith.constant 0 : i32
    %c0_i32_4 = arith.constant 0 : i32
    return %c0_i32, %c0_i32_0, %c0_i32_1, %c0_i32_2, %c0_i32_3 : i32, i32, i32, i32, i32
  }
  func.func @transform_1(%arg0: i32) -> (i32, i32) {
    %c0_i32 = arith.constant 0 : i32
    %c0_i32_0 = arith.constant 0 : i32
    %c0_i32_1 = arith.constant 0 : i32
    return %c0_i32, %c0_i32_0 : i32, i32
  }
  func.func @transform_2(%arg0: i32) -> (i32, i32, i32) {
    %c0_i32 = arith.constant 0 : i32
    %c0_i32_0 = arith.constant 0 : i32
    %c0_i32_1 = arith.constant 0 : i32
    return %arg0, %c0_i32, %c0_i32_0 : i32, i32, i32
  }
}

</mosaic_0001>

<llo_original>
// kernel: depthwise_conv3x3_s2.1
$region0: #{depthwise_conv3x3_s2.1}
  #allocation0 [shape = 'u32[]', space=smem, size = 0x4, offset = 0x4, fixed_abs, tag = 'smem constant byte address 0x4 - core index']
  #allocation1 [shape = 'u32[144,128]{1,0:T(1,128)}', space=vmem, size = 0x12000, scoped, tag = 'internal scratch']
  %s0 = inlined_call_operand.vmem [shape: f32[2,2,9,9,128], index: 0, kind: input, shape index: {}]
  %s1 = inlined_call_operand.vmem [shape: f32[9,128], index: 1, kind: input, shape index: {}]
  %s2 = inlined_call_operand.vmem [shape: f32[8,8,128], index: 2, kind: output, shape index: {}]
  %s3 = sld [smem:[#allocation0]]
  $region18: #{depthwise_conv3x3_s2.1} parent=0
    _
  %s5 = ssub.s32 1, %s3
  %s6 = scalar_select 0, %s5, %s3
  // Predicated region
  $region2: #{depthwise_conv3x3_s2.1} parent=0 // pred_check
    _
  $region3: #{depthwise_conv3x3_s2.1} parent=0 // pred_check_branch
    %8 = sbr.rel (0) target = $region5
  $region4: #{depthwise_conv3x3_s2.1} parent=0 // pred_region
    _
  $region5: #{depthwise_conv3x3_s2.1} parent=0 // pred_fallthru
    _
  // Predicated region
  $region6: #{depthwise_conv3x3_s2.1} parent=0 // pred_check
    _
  $region7: #{depthwise_conv3x3_s2.1} parent=0 // pred_check_branch
    %10 = sbr.rel (0) target = $region9
  $region8: #{depthwise_conv3x3_s2.1} parent=0 // pred_region
    _
  $region9: #{depthwise_conv3x3_s2.1} parent=0 // pred_fallthru
    _
  %s11 = smul.u32 0, 8
  %v12 = vld [vmem:[%s1] sm:$0xff]
  %v13 = vld [vmem:[%s1 + $0x8] sm:$0x1]
  %s14 = smul.u32 %s11, 16
  %s15 = scalar_lea.vmem %s0, %s14
  %v16 = vld [vmem:[%s15] sm:$0xff]
  %v17 = vld [vmem:[%s15 + $0x10] sm:$0xff]
  %v18 = vld [vmem:[%s15 + $0x20] sm:$0xff]
  %v19 = vld [vmem:[%s15 + $0x30] sm:$0xff]
  %v20 = vld [vmem:[%s15 + $0x40] sm:$0xff]
  %v21 = vld [vmem:[%s15 + $0x50] sm:$0xff]
  %v22 = vld [vmem:[%s15 + $0x60] sm:$0xff]
  %v23 = vld [vmem:[%s15 + $0x70] sm:$0xff]
  %v24 = vlaneseq
  %v25 = vshrl.u32 %v24, 7
  %v26 = vsub.s32 0, %v25
  %v27 = vrot.slane %v12, %v26
  %v28 = vmul.f32 %v16, %v27
  %v29 = vmul.f32 %v17, %v27
  %v30 = vmul.f32 %v18, %v27
  %v31 = vmul.f32 %v19, %v27
  %v32 = vmul.f32 %v20, %v27
  %v33 = vmul.f32 %v21, %v27
  %v34 = vmul.f32 %v22, %v27
  %v35 = vmul.f32 %v23, %v27
  %v36 = vadd.f32 %v28, 0.0
  %v37 = vadd.f32 %v29, 0.0
  %v38 = vadd.f32 %v30, 0.0
  %v39 = vadd.f32 %v31, 0.0
  %v40 = vadd.f32 %v32, 0.0
  %v41 = vadd.f32 %v33, 0.0
  %v42 = vadd.f32 %v34, 0.0
  %v43 = vadd.f32 %v35, 0.0
  %s44 = sadd.s32 %s14, 144
  %s45 = scalar_lea.vmem %s0, %s44
  %v46 = vld [vmem:[%s45] sm:$0xff]
  %v47 = vld [vmem:[%s45 + $0x10] sm:$0xff]
  %v48 = vld [vmem:[%s45 + $0x20] sm:$0xff]
  %v49 = vld [vmem:[%s45 + $0x30] sm:$0xff]
  %v50 = vld [vmem:[%s45 + $0x40] sm:$0xff]
  %v51 = vld [vmem:[%s45 + $0x50] sm:$0xff]
  %v52 = vld [vmem:[%s45 + $0x60] sm:$0xff]
  %v53 = vld [vmem:[%s45 + $0x70] sm:$0xff]
  %v54 = vlaneseq
  %v55 = vshrl.u32 %v54, 7
  %v56 = vsub.s32 1, %v55
  %v57 = vrot.slane %v12, %v56
  %v58 = vmul.f32 %v46, %v57
  %v59 = vmul.f32 %v47, %v57
  %v60 = vmul.f32 %v48, %v57
  %v61 = vmul.f32 %v49, %v57
  %v62 = vmul.f32 %v50, %v57
  %v63 = vmul.f32 %v51, %v57
  %v64 = vmul.f32 %v52, %v57
  %v65 = vmul.f32 %v53, %v57
  %v66 = vadd.f32 %v36, %v58
  %v67 = vadd.f32 %v37, %v59
  %v68 = vadd.f32 %v38, %v60
  %v69 = vadd.f32 %v39, %v61
  %v70 = vadd.f32 %v40, %v62
  %v71 = vadd.f32 %v41, %v63
  %v72 = vadd.f32 %v42, %v64
  %v73 = vadd.f32 %v43, %v65
  %v74 = vld [vmem:[%s15 + $0x1] sm:$0xff]
  %v75 = vld [vmem:[%s15 + $0x11] sm:$0xff]
  %v76 = vld [vmem:[%s15 + $0x21] sm:$0xff]
  %v77 = vld [vmem:[%s15 + $0x31] sm:$0xff]
  %v78 = vld [vmem:[%s15 + $0x41] sm:$0xff]
  %v79 = vld [vmem:[%s15 + $0x51] sm:$0xff]
  %v80 = vld [vmem:[%s15 + $0x61] sm:$0xff]
  %v81 = vld [vmem:[%s15 + $0x71] sm:$0xff]
  %v82 = vlaneseq
  %v83 = vshrl.u32 %v82, 7
  %v84 = vsub.s32 2, %v83
  %v85 = vrot.slane %v12, %v84
  %v86 = vmul.f32 %v74, %v85
  %v87 = vmul.f32 %v75, %v85
  %v88 = vmul.f32 %v76, %v85
  %v89 = vmul.f32 %v77, %v85
  %v90 = vmul.f32 %v78, %v85
  %v91 = vmul.f32 %v79, %v85
  %v92 = vmul.f32 %v80, %v85
  %v93 = vmul.f32 %v81, %v85
  %v94 = vadd.f32 %v66, %v86
  %v95 = vadd.f32 %v67, %v87
  %v96 = vadd.f32 %v68, %v88
  %v97 = vadd.f32 %v69, %v89
  %v98 = vadd.f32 %v70, %v90
  %v99 = vadd.f32 %v71, %v91
  %v100 = vadd.f32 %v72, %v92
  %v101 = vadd.f32 %v73, %v93
  %s102 = sadd.s32 %s14, 288
  %s103 = scalar_lea.vmem %s0, %s102
  %v104 = vld [vmem:[%s103] sm:$0xff]
  %v105 = vld [vmem:[%s103 + $0x10] sm:$0xff]
  %v106 = vld [vmem:[%s103 + $0x20] sm:$0xff]
  %v107 = vld [vmem:[%s103 + $0x30] sm:$0xff]
  %v108 = vld [vmem:[%s103 + $0x40] sm:$0xff]
  %v109 = vld [vmem:[%s103 + $0x50] sm:$0xff]
  %v110 = vld [vmem:[%s103 + $0x60] sm:$0xff]
  %v111 = vld [vmem:[%s103 + $0x70] sm:$0xff]
  %v112 = vlaneseq
  %v113 = vshrl.u32 %v112, 7
  %v114 = vsub.s32 3, %v113
  %v115 = vrot.slane %v12, %v114
  %v116 = vmul.f32 %v104, %v115
  %v117 = vmul.f32 %v105, %v115
  %v118 = vmul.f32 %v106, %v115
  %v119 = vmul.f32 %v107, %v115
  %v120 = vmul.f32 %v108, %v115
  %v121 = vmul.f32 %v109, %v115
  %v122 = vmul.f32 %v110, %v115
  %v123 = vmul.f32 %v111, %v115
  %v124 = vadd.f32 %v94, %v116
  %v125 = vadd.f32 %v95, %v117
  %v126 = vadd.f32 %v96, %v118
  %v127 = vadd.f32 %v97, %v119
  %v128 = vadd.f32 %v98, %v120
  %v129 = vadd.f32 %v99, %v121
  %v130 = vadd.f32 %v100, %v122
  %v131 = vadd.f32 %v101, %v123
  %s132 = sadd.s32 %s44, 288
  %s133 = scalar_lea.vmem %s0, %s132
  %v134 = vld [vmem:[%s133] sm:$0xff]
  %v135 = vld [vmem:[%s133 + $0x10] sm:$0xff]
  %v136 = vld [vmem:[%s133 + $0x20] sm:$0xff]
  %v137 = vld [vmem:[%s133 + $0x30] sm:$0xff]
  %v138 = vld [vmem:[%s133 + $0x40] sm:$0xff]
  %v139 = vld [vmem:[%s133 + $0x50] sm:$0xff]
  %v140 = vld [vmem:[%s133 + $0x60] sm:$0xff]
  %v141 = vld [vmem:[%s133 + $0x70] sm:$0xff]
  %v142 = vlaneseq
  %v143 = vshrl.u32 %v142, 7
  %v144 = vsub.s32 4, %v143
  %v145 = vrot.slane %v12, %v144
  %v146 = vmul.f32 %v134, %v145
  %v147 = vmul.f32 %v135, %v145
  %v148 = vmul.f32 %v136, %v145
  %v149 = vmul.f32 %v137, %v145
  %v150 = vmul.f32 %v138, %v145
  %v151 = vmul.f32 %v139, %v145
  %v152 = vmul.f32 %v140, %v145
  %v153 = vmul.f32 %v141, %v145
  %v154 = vadd.f32 %v124, %v146
  %v155 = vadd.f32 %v125, %v147
  %v156 = vadd.f32 %v126, %v148
  %v157 = vadd.f32 %v127, %v149
  %v158 = vadd.f32 %v128, %v150
  %v159 = vadd.f32 %v129, %v151
  %v160 = vadd.f32 %v130, %v152
  %v161 = vadd.f32 %v131, %v153
  %v162 = vld [vmem:[%s103 + $0x1] sm:$0xff]
  %v163 = vld [vmem:[%s103 + $0x11] sm:$0xff]
  %v164 = vld [vmem:[%s103 + $0x21] sm:$0xff]
  %v165 = vld [vmem:[%s103 + $0x31] sm:$0xff]
  %v166 = vld [vmem:[%s103 + $0x41] sm:$0xff]
  %v167 = vld [vmem:[%s103 + $0x51] sm:$0xff]
  %v168 = vld [vmem:[%s103 + $0x61] sm:$0xff]
  %v169 = vld [vmem:[%s103 + $0x71] sm:$0xff]
  %v170 = vlaneseq
  %v171 = vshrl.u32 %v170, 7
  %v172 = vsub.s32 5, %v171
  %v173 = vrot.slane %v12, %v172
  %v174 = vmul.f32 %v162, %v173
  %v175 = vmul.f32 %v163, %v173
  %v176 = vmul.f32 %v164, %v173
  %v177 = vmul.f32 %v165, %v173
  %v178 = vmul.f32 %v166, %v173
  %v179 = vmul.f32 %v167, %v173
  %v180 = vmul.f32 %v168, %v173
  %v181 = vmul.f32 %v169, %v173
  %v182 = vadd.f32 %v154, %v174
  %v183 = vadd.f32 %v155, %v175
  %v184 = vadd.f32 %v156, %v176
  %v185 = vadd.f32 %v157, %v177
  %v186 = vadd.f32 %v158, %v178
  %v187 = vadd.f32 %v159, %v179
  %v188 = vadd.f32 %v160, %v180
  %v189 = vadd.f32 %v161, %v181
  %s190 = sadd.s32 %s11, 1
  %s191 = smul.u32 %s190, 16
  %s192 = scalar_lea.vmem %s0, %s191
  %v193 = vld [vmem:[%s192] sm:$0xff]
  %v194 = vld [vmem:[%s192 + $0x10] sm:$0xff]
  %v195 = vld [vmem:[%s192 + $0x20] sm:$0xff]
  %v196 = vld [vmem:[%s192 + $0x30] sm:$0xff]
  %v197 = vld [vmem:[%s192 + $0x40] sm:$0xff]
  %v198 = vld [vmem:[%s192 + $0x50] sm:$0xff]
  %v199 = vld [vmem:[%s192 + $0x60] sm:$0xff]
  %v200 = vld [vmem:[%s192 + $0x70] sm:$0xff]
  %v201 = vlaneseq
  %v202 = vshrl.u32 %v201, 7
  %v203 = vsub.s32 6, %v202
  %v204 = vrot.slane %v12, %v203
  %v205 = vmul.f32 %v193, %v204
  %v206 = vmul.f32 %v194, %v204
  %v207 = vmul.f32 %v195, %v204
  %v208 = vmul.f32 %v196, %v204
  %v209 = vmul.f32 %v197, %v204
  %v210 = vmul.f32 %v198, %v204
  %v211 = vmul.f32 %v199, %v204
  %v212 = vmul.f32 %v200, %v204
  %v213 = vadd.f32 %v182, %v205
  %v214 = vadd.f32 %v183, %v206
  %v215 = vadd.f32 %v184, %v207
  %v216 = vadd.f32 %v185, %v208
  %v217 = vadd.f32 %v186, %v209
  %v218 = vadd.f32 %v187, %v210
  %v219 = vadd.f32 %v188, %v211
  %v220 = vadd.f32 %v189, %v212
  %s221 = sadd.s32 %s191, 144
  %s222 = scalar_lea.vmem %s0, %s221
  %v223 = vld [vmem:[%s222] sm:$0xff]
  %v224 = vld [vmem:[%s222 + $0x10] sm:$0xff]
  %v225 = vld [vmem:[%s222 + $0x20] sm:$0xff]
  %v226 = vld [vmem:[%s222 + $0x30] sm:$0xff]
  %v227 = vld [vmem:[%s222 + $0x40] sm:$0xff]
  %v228 = vld [vmem:[%s222 + $0x50] sm:$0xff]
  %v229 = vld [vmem:[%s222 + $0x60] sm:$0xff]
  %v230 = vld [vmem:[%s222 + $0x70] sm:$0xff]
  %v231 = vlaneseq
  %v232 = vshrl.u32 %v231, 7
  %v233 = vsub.s32 7, %v232
  %v234 = vrot.slane %v12, %v233
  %v235 = vmul.f32 %v223, %v234
  %v236 = vmul.f32 %v224, %v234
  %v237 = vmul.f32 %v225, %v234
  %v238 = vmul.f32 %v226, %v234
  %v239 = vmul.f32 %v227, %v234
  %v240 = vmul.f32 %v228, %v234
  %v241 = vmul.f32 %v229, %v234
  %v242 = vmul.f32 %v230, %v234
  %v243 = vadd.f32 %v213, %v235
  %v244 = vadd.f32 %v214, %v236
  %v245 = vadd.f32 %v215, %v237
  %v246 = vadd.f32 %v216, %v238
  %v247 = vadd.f32 %v217, %v239
  %v248 = vadd.f32 %v218, %v240
  %v249 = vadd.f32 %v219, %v241
  %v250 = vadd.f32 %v220, %v242
  %v251 = vld [vmem:[%s192 + $0x1] sm:$0xff]
  %v252 = vld [vmem:[%s192 + $0x11] sm:$0xff]
  %v253 = vld [vmem:[%s192 + $0x21] sm:$0xff]
  %v254 = vld [vmem:[%s192 + $0x31] sm:$0xff]
  %v255 = vld [vmem:[%s192 + $0x41] sm:$0xff]
  %v256 = vld [vmem:[%s192 + $0x51] sm:$0xff]
  %v257 = vld [vmem:[%s192 + $0x61] sm:$0xff]
  %v258 = vld [vmem:[%s192 + $0x71] sm:$0xff]
  %v259 = vlaneseq
  %v260 = vshrl.u32 %v259, 7
  %v261 = vsub.s32 0, %v260
  %v262 = vrot.slane %v13, %v261
  %v263 = vmul.f32 %v251, %v262
  %v264 = vmul.f32 %v252, %v262
  %v265 = vmul.f32 %v253, %v262
  %v266 = vmul.f32 %v254, %v262
  %v267 = vmul.f32 %v255, %v262
  %v268 = vmul.f32 %v256, %v262
  %v269 = vmul.f32 %v257, %v262
  %v270 = vmul.f32 %v258, %v262
  %v271 = vadd.f32 %v243, %v263
  %v272 = vadd.f32 %v244, %v264
  %v273 = vadd.f32 %v245, %v265
  %v274 = vadd.f32 %v246, %v266
  %v275 = vadd.f32 %v247, %v267
  %v276 = vadd.f32 %v248, %v268
  %v277 = vadd.f32 %v249, %v269
  %v278 = vadd.f32 %v250, %v270
  %279 = vst [vmem:[%s2] sm:$0xff] %v271
  %280 = vst [vmem:[%s2 + $0x8] sm:$0xff] %v272
  %281 = vst [vmem:[%s2 + $0x10] sm:$0xff] %v273
  %282 = vst [vmem:[%s2 + $0x18] sm:$0xff] %v274
  %283 = vst [vmem:[%s2 + $0x20] sm:$0xff] %v275
  %284 = vst [vmem:[%s2 + $0x28] sm:$0xff] %v276
  %285 = vst [vmem:[%s2 + $0x30] sm:$0xff] %v277
  %286 = vst [vmem:[%s2 + $0x38] sm:$0xff] %v278
  // Predicated region
  $region10: #{depthwise_conv3x3_s2.1} parent=0 // pred_check
    _
  $region11: #{depthwise_conv3x3_s2.1} parent=0 // pred_check_branch
    %288 = sbr.rel (0) target = $region13
  $region12: #{depthwise_conv3x3_s2.1} parent=0 // pred_region
    _
  $region13: #{depthwise_conv3x3_s2.1} parent=0 // pred_fallthru
    _
  // Predicated region
  $region14: #{depthwise_conv3x3_s2.1} parent=0 // pred_check
    _
  $region15: #{depthwise_conv3x3_s2.1} parent=0 // pred_check_branch
    %290 = sbr.rel (0) target = $region17
  $region16: #{depthwise_conv3x3_s2.1} parent=0 // pred_region
    _
  $region17: #{depthwise_conv3x3_s2.1} parent=0 // pred_fallthru
    _

</llo_original>
